<compile_context>
chip_gen: v7x
topology: tpu7x:2x2x1
jax: 0.10.0
libtpu: 0.0.40
codegen_flags: <defaults>
</compile_context>

<pallas_src>
import jax
import jax.numpy as jnp
from jax.experimental import pallas as pl
from jax.experimental.pallas import tpu as pltpu

_LN2 = 0.6931471805599453


def _asinh_kernel(x_ref, o_ref):
    x = x_ref[...].astype(jnp.float32)
    ax = jnp.abs(x)
    # Numerically stable asinh:
    #   tiny |x| :  asinh(x) ~= x                 (avoids log cancellation near 0)
    #   huge |x| :  asinh(x) ~= log(2) + log|x|   (avoids x*x overflow -> inf)
    #   else     :  log(|x| + sqrt(x^2 + 1))
    mid = jnp.log(ax + jnp.sqrt(ax * ax + 1.0))
    big = jnp.float32(_LN2) + jnp.log(ax)
    y = jnp.where(ax > 1e18, big, mid)
    y = jnp.where(ax < 1e-4, ax, y)
    o_ref[...] = jnp.copysign(y, x).astype(o_ref.dtype)


def asinh_pallas(x, *, target_block_bytes=2 * 1024 * 1024):
    orig_shape = x.shape
    orig_dtype = x.dtype
    n = x.size
    if n == 0:
        return x

    lane = 128
    sub = 8

    xf = x.reshape(-1)
    # Only pad up to the next lane (128) boundary; partial sublane rows at the
    # grid edge are handled by masked edge blocks (elementwise ⇒ safe).
    n_pad = ((n + lane - 1) // lane) * lane
    padded = n_pad != n
    if padded:
        xf = jnp.concatenate([xf, jnp.zeros((n_pad - n,), dtype=orig_dtype)])
    rows = n_pad // lane
    x2d = xf.reshape(rows, lane)

    # Block sizing: ~2 MiB per block, rounded to a multiple of 8 sublanes.
    bytes_per_row = lane * jnp.dtype(orig_dtype).itemsize
    block_rows = max(sub, min(rows, target_block_bytes // bytes_per_row))
    block_rows = max(sub, (block_rows // sub) * sub)
    # Ensure at least 2 grid steps when there is enough work (v7x dual-TC sharding).
    if rows > sub and block_rows >= rows:
        block_rows = max(sub, (((rows + 1) // 2) // sub) * sub)

    grid = (pl.cdiv(rows, block_rows),)  # partial edge block is fine (elementwise)

    out2d = pl.pallas_call(
        _asinh_kernel,
        out_shape=jax.ShapeDtypeStruct((rows, lane), orig_dtype),
        grid_spec=pltpu.PrefetchScalarGridSpec(
            num_scalar_prefetch=0,
            grid=grid,
            in_specs=[pl.BlockSpec((block_rows, lane), lambda i: (i, 0))],
            out_specs=pl.BlockSpec((block_rows, lane), lambda i: (i, 0)),
        ),
        compiler_params=pltpu.CompilerParams(
            dimension_semantics=("parallel",)),
    )(x2d)

    if padded:
        return out2d.reshape(-1)[:n].reshape(orig_shape)
    return out2d.reshape(orig_shape)


if __name__ == "__main__":
    key = jax.random.PRNGKey(0)
    x = jax.random.normal(key, (2, 4, 16, 16), dtype=jnp.float32) * 3.0

    out = asinh_pallas(x)
    jax.block_until_ready(out)

    # sanity check vs pure-JAX reference
    ref = jnp.arcsinh(x)
    assert out.shape == x.shape and out.dtype == x.dtype
    assert jnp.max(jnp.abs(out - ref)) < 1e-5, "mismatch vs jnp.arcsinh"

    # robustness check: tiny / huge magnitudes and a ragged (non-multiple-of-128) size
    x2 = jnp.array([0.0, -0.0, 1e-8, -1e-8, 1e20, -1e20, 3.0, -3.0, 0.5],
                   dtype=jnp.float32)
    out2 = asinh_pallas(x2)
    jax.block_until_ready(out2)
    ref2 = jnp.arcsinh(x2)
    assert bool(jnp.all(jnp.isfinite(out2))), "overflow in asinh kernel"
    rel = jnp.max(jnp.abs(out2 - ref2) / jnp.maximum(jnp.abs(ref2), 1.0))
    assert rel < 1e-5, "mismatch vs jnp.arcsinh on extreme values"

    print("KERNEL_OK")
</pallas_src>

<mosaic_0001>
module attributes {stable_mosaic.version = 11 : i64} {
  func.func @_asinh_kernel(%arg0: i32, %arg1: memref<8x128xf32, #tpu.memory_space<vmem>>, %arg2: memref<8x128xf32, #tpu.memory_space<vmem>>) attributes {dimension_semantics = [#tpu.dimension_semantics<parallel>], iteration_bounds = array<i64: 2>, scalar_prefetch = 0 : i64, scratch_operands = 0 : i64, tpu.core_type = #tpu.core_type<tc>, window_params = [{transform_indices = @transform_0, window_bounds = array<i64: 8, 128>}, {transform_indices = @transform_1, window_bounds = array<i64: 8, 128>}]} {
    %c0 = arith.constant 0 : index
    %c0_0 = arith.constant 0 : index
    %0 = vector.load %arg1[%c0, %c0_0] : memref<8x128xf32, #tpu.memory_space<vmem>>, vector<8x128xf32>
    %1 = math.absf %0 : vector<8x128xf32>
    %2 = arith.mulf %1, %1 : vector<8x128xf32>
    %cst = arith.constant 1.000000e+00 : f32
    %3 = vector.broadcast %cst : f32 to vector<8x128xf32>
    %4 = arith.addf %2, %3 : vector<8x128xf32>
    %5 = math.sqrt %4 : vector<8x128xf32>
    %6 = arith.addf %1, %5 : vector<8x128xf32>
    %7 = math.log %6 : vector<8x128xf32>
    %8 = math.log %1 : vector<8x128xf32>
    %cst_1 = arith.constant 0.693147182 : f32
    %9 = vector.broadcast %cst_1 : f32 to vector<8x128xf32>
    %10 = arith.addf %9, %8 : vector<8x128xf32>
    %cst_2 = arith.constant 9.99999984E+17 : f32
    %11 = vector.broadcast %cst_2 : f32 to vector<8x128xf32>
    %12 = arith.cmpf ogt, %1, %11 : vector<8x128xf32>
    %13 = arith.select %12, %10, %7 : vector<8x128xi1>, vector<8x128xf32>
    %cst_3 = arith.constant 9.99999974E-5 : f32
    %14 = vector.broadcast %cst_3 : f32 to vector<8x128xf32>
    %15 = arith.cmpf olt, %1, %14 : vector<8x128xf32>
    %16 = arith.select %15, %1, %13 : vector<8x128xi1>, vector<8x128xf32>
    %17 = tpu.bitcast %0 : vector<8x128xf32> -> vector<8x128xi32>
    %c31_i32 = arith.constant 31 : i32
    %18 = vector.broadcast %c31_i32 : i32 to vector<8x128xi32>
    %19 = arith.shrsi %17, %18 : vector<8x128xi32>
    %c0_i32 = arith.constant 0 : i32
    %20 = vector.broadcast %c0_i32 : i32 to vector<8x128xi32>
    %21 = arith.cmpi ne, %19, %20 : vector<8x128xi32>
    %22 = math.absf %16 : vector<8x128xf32>
    %cst_4 = arith.constant 0.000000e+00 : f32
    %23 = vector.broadcast %cst_4 : f32 to vector<8x128xf32>
    %24 = arith.subf %23, %22 : vector<8x128xf32>
    %25 = math.absf %16 : vector<8x128xf32>
    %26 = arith.select %21, %24, %25 : vector<8x128xi1>, vector<8x128xf32>
    %c0_5 = arith.constant 0 : index
    %c0_6 = arith.constant 0 : index
    %27 = vector.load %arg2[%c0_5, %c0_6] : memref<8x128xf32, #tpu.memory_space<vmem>>, vector<8x128xf32>
    tpu.vector_store %arg2[%c0_5, %c0_6], %26 {strides = array<i32>} : memref<8x128xf32, #tpu.memory_space<vmem>>, vector<8x128xf32>,
    return
  }
  func.func @transform_0(%arg0: i32) -> (i32, i32) {
    %c0_i32 = arith.constant 0 : i32
    %c0_i32_0 = arith.constant 0 : i32
    return %arg0, %c0_i32 : i32, i32
  }
  func.func @transform_1(%arg0: i32) -> (i32, i32) {
    %c0_i32 = arith.constant 0 : i32
    %c0_i32_0 = arith.constant 0 : i32
    return %arg0, %c0_i32 : i32, i32
  }
}

</mosaic_0001>

<llo_original>
// kernel: tpu_custom_call.1
$region0: #{tpu_custom_call.1}
  #allocation0 [shape = 'u32[]', space=smem, size = 0x4, offset = 0x4, fixed_abs, tag = 'smem constant byte address 0x4 - core index']
  #allocation1 [shape = 'u32[144,128]{1,0:T(1,128)}', space=vmem, size = 0x12000, scoped, tag = 'internal scratch']
  %s0 = inlined_call_operand.hbm [shape: f32[16,128], index: 0, kind: input, shape index: {}]
  %s1 = inlined_call_operand.hbm [shape: f32[16,128], index: 1, kind: output, shape index: {}]
  %s2 = sld [smem:[#allocation0]]
  $region41: #{tpu_custom_call.1} parent=0
    _
  %s4 = ssub.s32 1, %s2
  %s5 = scalar_select 0, %s4, %s2
  $region1: #{tpu_custom_call.1} parent=0
    #allocation2 [shape = 'u8[8192]{0}', space=vmem, size = 0x2000, scoped, tag = 'input window, operand 0']
    #allocation3 [shape = 's32[2]{0}', space=sflag, size = 0x8, scoped, tag = 'scoped memory for tpu_custom_call.1']
    #allocation4 [shape = 's32[2]{0}', space=sflag, size = 0x8, scoped, tag = 'scoped memory for tpu_custom_call.1']
    #allocation5 [shape = 'u8[8192]{0}', space=vmem, size = 0x2000, scoped, tag = 'output window, operand 0']
    %6 = vsyncpa [#allocation3], 0
    %s7 = scalar_lea.sflag [#allocation3], 1
    %8 = vsyncpa %s7, 0
    %9 = vsyncpa [#allocation4], 0
    %s10 = scalar_lea.sflag [#allocation4], 1
    %11 = vsyncpa %s10, 0
    loop: start=0, step=1, limit=4
    $region2: #{tpu_custom_call.1} parent=1 // loop_pre_header
      _
    $region3: #{tpu_custom_call.1} parent=1 // loop_header
      %s13 = sphi 0, %s17
      %p14 = scmp.ge.s32.totalorder %s13, 4
      %s23 = sphi 0, %s25
      %s26 = sphi 0, %s23
      %s27 = sphi 0, %s26
      %s43 = sphi 0, %s27
      %s49 = sphi 0, %s51
      %s52 = sphi 0, %s49
      %s53 = sphi 0, %s52
      %s69 = sphi 0, %s53
    $region4: #{tpu_custom_call.1} parent=1 // loop_header_branch
      %16 = sbr.rel (%p14) target = $region8
    $region5: #{tpu_custom_call.1} parent=1 // loop_body
      %s18 = ssub.s32 %s13, 1
      %s19 = ssub.s32 %s13, 2
      %s20 = sadd.s32 %s13, 1
      %s21 = ssub.s32 %s13, %s20
      %p22 = scmp.eq.s32.totalorder %s21, 0
      %s24 = sadd.s32 %s23, 1
      %s25 = scalar_select %p22, %s23, %s24
      %p28 = pneg %p22
      %p29 = scmp.eq.s32.totalorder %s13, 1
      %p30 = por %p28, %p29
      %p31 = scmp.ne.s32.totalorder %s23, %s26
      %p32 = scmp.eq.s32.totalorder %s13, 0
      %p33 = por %p31, %p32
      %p34 = scmp.ne.s32.totalorder %s23, %s26
      %p35 = scmp.eq.s32.totalorder %s18, 1
      %p36 = por %p34, %p35
      %p37 = scmp.ne.s32.totalorder %s26, %s27
      %p38 = scmp.eq.s32.totalorder %s18, 0
      %p39 = por %p37, %p38
      %p40 = scmp.ne.s32.totalorder %s26, %s27
      %p41 = scmp.eq.s32.totalorder %s19, 1
      %p42 = por %p40, %p41
      %p44 = scmp.ne.s32.totalorder %s27, %s43
      %p45 = scmp.eq.s32.totalorder %s19, 0
      %p46 = por %p44, %p45
      %s47 = ssub.s32 %s13, %s20
      %p48 = scmp.eq.s32.totalorder %s47, 0
      %s50 = sadd.s32 %s49, 1
      %s51 = scalar_select %p48, %s49, %s50
      %p54 = pneg %p48
      %p55 = scmp.eq.s32.totalorder %s13, 1
      %p56 = por %p54, %p55
      %p57 = scmp.ne.s32.totalorder %s49, %s52
      %p58 = scmp.eq.s32.totalorder %s13, 0
      %p59 = por %p57, %p58
      %p60 = scmp.ne.s32.totalorder %s49, %s52
      %p61 = scmp.eq.s32.totalorder %s18, 1
      %p62 = por %p60, %p61
      %p63 = scmp.ne.s32.totalorder %s52, %s53
      %p64 = scmp.eq.s32.totalorder %s18, 0
      %p65 = por %p63, %p64
      %p66 = scmp.ne.s32.totalorder %s52, %s53
      %p67 = scmp.eq.s32.totalorder %s19, 1
      %p68 = por %p66, %p67
      %p70 = scmp.ne.s32.totalorder %s53, %s69
      %p71 = scmp.eq.s32.totalorder %s19, 0
      %p72 = por %p70, %p71
      %p73 = scmp.le.s32.totalorder 1, %s13
      %p74 = scmp.lt.s32.totalorder %s13, 3
      %p75 = pnand %p73, %p74
      %p76 = pneg %p75
      // Predicated region
      $region9: #{tpu_custom_call.1} parent=5 // pred_check
        _
      $region10: #{tpu_custom_call.1} parent=5 // pred_check_branch
        %78 = sbr.rel (%p75) target = $region12
      $region11: #{tpu_custom_call.1} parent=5 // pred_region
        %s79 = ssub.s32 %s13, 1
      $region12: #{tpu_custom_call.1} parent=5 // pred_fallthru
        _
      %p80 = scmp.lt.s32.totalorder %s13, 2
      // Predicated region
      $region13: #{tpu_custom_call.1} parent=5 // pred_check
        %p81 = pneg %p80
      $region14: #{tpu_custom_call.1} parent=5 // pred_check_branch
        %83 = sbr.rel (%p81) target = $region16
      $region15: #{tpu_custom_call.1} parent=5 // pred_region
        // Predicated region
        $region17: #{tpu_custom_call.1} parent=15 // pred_check
          %p84 = pneg %p33
        $region18: #{tpu_custom_call.1} parent=15 // pred_check_branch
          %86 = sbr.rel (%p84) target = $region20
        $region19: #{tpu_custom_call.1} parent=15 // pred_region
          %s87 = sand.u32 %s23, 1
          %s88 = scalar_lea.sflag [#allocation3], %s87
          %s89 = sand.u32 %s23, 1
          %s90 = smul.addr %s89, 8
          %s91 = scalar_lea.vmem [#allocation2], %s90
          %s93 = ssub.s32 128, 128
          %94 = vsyncadd %s88, %s93
          %s95 = smul.addr %s13, 128
          %s96 = scalar_lea.hbm %s0, %s95
          %s98 = sshll.u32 %s91, 4
          %s99 = int_to_ptr.vmem [resolvable:$true] %s98
          %101 = dma.hbm_to_vmem [thread:$0]  %s96, 128, %s99, %s88
        $region20: #{tpu_custom_call.1} parent=15 // pred_fallthru
          _
      $region16: #{tpu_custom_call.1} parent=5 // pred_fallthru
        _
      %p102 = scmp.le.s32.totalorder 1, %s13
      %p103 = scmp.lt.s32.totalorder %s13, 3
      %p104 = pnand %p102, %p103
      %p105 = pneg %p104
      // Predicated region
      $region21: #{tpu_custom_call.1} parent=5 // pred_check
        _
      $region22: #{tpu_custom_call.1} parent=5 // pred_check_branch
        %107 = sbr.rel (%p104) target = $region24
      $region23: #{tpu_custom_call.1} parent=5 // pred_region
        %s108 = ssub.s32 %s13, 1
        %s109 = sand.u32 %s26, 1
        %s110 = scalar_lea.sflag [#allocation3], %s109
        %s111 = sand.u32 %s26, 1
        %s112 = smul.addr %s111, 8
        %s113 = scalar_lea.vmem [#allocation2], %s112
        // Predicated region
        $region25: #{tpu_custom_call.1} parent=23 // pred_check
          %p114 = pneg %p39
        $region26: #{tpu_custom_call.1} parent=23 // pred_check_branch
          %116 = sbr.rel (%p114) target = $region28
        $region27: #{tpu_custom_call.1} parent=23 // pred_region
          %117 = dma.done %s110, 128
        $region28: #{tpu_custom_call.1} parent=23 // pred_fallthru
          _
        %s118 = sand.u32 %s26, 1
        %s119 = scalar_lea.sflag [#allocation3], %s118
        %s120 = sand.u32 %s26, 1
        %s121 = smul.addr %s120, 8
        %s122 = scalar_lea.vmem [#allocation2], %s121
        %p123 = pneg %p39
        %p124 = pneg %p36
        %p125 = pneg %p65
        %p126 = pneg %p62
        %s127 = sand.u32 %s52, 1
        %s128 = scalar_lea.sflag [#allocation4], %s127
        %s129 = sand.u32 %s52, 1
        %s130 = smul.addr %s129, 8
        %s131 = scalar_lea.vmem [#allocation5], %s130
        %v132 = vld [vmem:[%s113] sm:$0xff]
        %v133 = vand.u32 2147483647, %v132
        %v134 = vmul.f32 %v133, %v133
        %v135 = vadd.f32 %v134, 1.0
        %v136 = vrsqrt.pop %v135
        %v137 = vmul.f32 %v135, %v136
        %vm138 = vcmp.eq.f32.partialorder %v135, inf
        %v139 = vsel %vm138, %v135, %v137
        %vm140 = vcmp.eq.f32.partialorder %v135, 0.0
        %v141 = vand.u32 %v135, 2147483648
        %v142 = vsel %vm140, %v141, %v139
        %v143 = vadd.f32 %v133, %v142
        %v144 = vlog2.pop %v143
        %v145 = vmul.f32 %v144, 0.6931472
        %v146 = vlog2.pop %v133
        %v147 = vmul.f32 %v146, 0.6931472
        %v148 = vadd.f32 %v147, 0.6931472
        %vm149 = vcmp.gt.f32.partialorder %v133, 1e+18
        %v150 = vsel %vm149, %v148, %v145
        %vm151 = vcmp.lt.f32.partialorder %v133, 0.0001
        %v152 = vsel %vm151, %v133, %v150
        %v154 = vshra.s32 %v132, 31
        %vm155 = vcmp.ne.s32.totalorder %v154, 0
        %v156 = vand.u32 2147483647, %v152
        %v157 = vsub.f32 0.0, %v156
        %v158 = vsel %vm155, %v157, %v156
        %159 = vst [vmem:[%s131] sm:$0xff] %v158
        %s160 = sand.u32 %s52, 1
        %s161 = scalar_lea.sflag [#allocation4], %s160
        %s162 = sand.u32 %s52, 1
        %s163 = smul.addr %s162, 8
        %s164 = scalar_lea.vmem [#allocation5], %s163
        // Predicated region
        $region29: #{tpu_custom_call.1} parent=23 // pred_check
          %p165 = pneg %p62
        $region30: #{tpu_custom_call.1} parent=23 // pred_check_branch
          %167 = sbr.rel (%p165) target = $region32
        $region31: #{tpu_custom_call.1} parent=23 // pred_region
          %s169 = ssub.s32 128, 128
          %170 = vsyncadd %s161, %s169
          %s171 = smul.addr %s18, 128
          %s172 = scalar_lea.hbm %s1, %s171
          %s174 = sshll.u32 %s164, 4
          %s175 = int_to_ptr.vmem [resolvable:$true] %s174
          %177 = dma.vmem_to_hbm [thread:$0]  %s175, 128, %s172, %s161
        $region32: #{tpu_custom_call.1} parent=23 // pred_fallthru
          _
      $region24: #{tpu_custom_call.1} parent=5 // pred_fallthru
        _
      %p178 = scmp.le.s32.totalorder 2, %s13
      // Predicated region
      $region33: #{tpu_custom_call.1} parent=5 // pred_check
        %p179 = pneg %p178
      $region34: #{tpu_custom_call.1} parent=5 // pred_check_branch
        %181 = sbr.rel (%p179) target = $region36
      $region35: #{tpu_custom_call.1} parent=5 // pred_region
        %s182 = ssub.s32 %s13, 2
        // Predicated region
        $region37: #{tpu_custom_call.1} parent=35 // pred_check
          %p183 = pneg %p68
        $region38: #{tpu_custom_call.1} parent=35 // pred_check_branch
          %185 = sbr.rel (%p183) target = $region40
        $region39: #{tpu_custom_call.1} parent=35 // pred_region
          %s186 = sand.u32 %s53, 1
          %s187 = scalar_lea.sflag [#allocation4], %s186
          %s188 = sand.u32 %s53, 1
          %s189 = smul.addr %s188, 8
          %s190 = scalar_lea.vmem [#allocation5], %s189
          %191 = dma.done %s187, 128
        $region40: #{tpu_custom_call.1} parent=35 // pred_fallthru
          _
      $region36: #{tpu_custom_call.1} parent=5 // pred_fallthru
        _
    $region6: #{tpu_custom_call.1} parent=1 // loop_footer
      %s17 = sadd.s32 1, %s13
    $region7: #{tpu_custom_call.1} parent=1 // loop_footer_branch
      %12 = sbr.rel target = $region3
    $region8: #{tpu_custom_call.1} parent=1 // loop_exit
      _
    %192 = vsyncpa [#allocation3], 1
    %s193 = scalar_lea.sflag [#allocation3], 1
    %194 = vsyncpa %s193, 1
    %195 = vsyncpa [#allocation4], 1
    %s196 = scalar_lea.sflag [#allocation4], 1
    %197 = vsyncpa %s196, 1

</llo_original>
